<compile_context>
chip_gen: v5e
topology: v5e:2x2
jax: 0.10.0
libtpu: 0.0.40
codegen_flags: <defaults>
</compile_context>

<pallas_src>
import functools

import jax
import jax.numpy as jnp
from jax import lax
from jax.experimental import pallas as pl
from jax.experimental.pallas import tpu as pltpu

PRODUCT_QUERY_EMBEDDINGS_SIZE = 50
NORMALIZE_EPS = 1e-12      # torch F.normalize default eps
_TB_MAX = 4096             # batch-tile rows (multiple of 8); see VMEM math above


def _round_up(x, m):
    return ((x + m - 1) // m) * m


def _search_kernel(q_dim, k_code, q_ref, sel_seq_ref, sel_row_ref, ev_ref, w_ref,
                   b_ref, out_ref):
    """One batch tile of the SearchModule forward hot path.

    q_ref      : [TB, S*Q]   f32  flat_query_vector_trunc rows (lane-dense)
    sel_seq_ref: [S*Q, Q]    f32  0/1 matrix summing the S positions per embed dim
    sel_row_ref: [k_code, 2] f32  0/1 matrix summing positions of seq rows 0 / 1
    ev_ref     : [1, Q]      f32  empty_query_vector
    w_ref      : [Q, D]      f32  Linear weight (transposed), pre-scaled by 0.5
    b_ref      : [1, D]      f32  Linear bias
    out_ref    : [TB, D]     f32
    """
    q = q_ref[...]                                            # [TB, S*Q]

    # torch F.normalize(p=2, dim=1): q[b, s, d] is divided by the L2 norm over the
    # SEQUENCE axis of q[b, :, d].  The per-dim sum of squares is one MXU matmul
    # of q*q against a constant 0/1 selection matrix -> no cross-sublane reduce.
    qsq = q * q                                               # [TB, S*Q]
    sumsq = jnp.dot(qsq, sel_seq_ref[...],
                    preferred_element_type=jnp.float32)       # [TB, Q]
    # clamp at eps^2  ==  1 / max(norm, eps)  of torch F.normalize.
    rnorm = lax.rsqrt(jnp.maximum(sumsq, NORMALIZE_EPS * NORMALIZE_EPS))

    # Only sequence rows 0 and 1 survive the [:, :2] slice: static lane slices.
    row0 = q[:, 0:q_dim]                                      # [TB, Q]
    row1 = q[:, q_dim:2 * q_dim]                              # [TB, Q]

    # "Empty query" mask: max over the 50-dim embedding == 0.  Checked on raw q,
    # which is equivalent to checking the normalized rows because the positive
    # per-dim norms preserve signs and exact zeros.  Computed WITHOUT a cross-lane
    # max (XLU) by integer coding + a tiny MXU matmul:
    #   code = 1024 if x > 0, 1 if x == 0, 0 if x < 0
    #   sum(code over a row) <  1024  <=>  no positive element
    #   sum(code over a row) >= 1     <=>  at least one exact zero
    # both together <=> max(row) == 0.  All operands are small integers
    # (<= 50*1024 < 2^24), so any MXU precision computes the sums exactly.
    head = q[:, 0:k_code]                                     # first lane group
    code = jnp.where(head > 0.0, 1024.0,
                     jnp.where(head == 0.0, 1.0, 0.0))        # [TB, k_code]
    rowsum = jnp.dot(code, sel_row_ref[...],
                     preferred_element_type=jnp.float32)      # [TB, 2]
    empty0 = (rowsum[:, 0:1] >= 1.0) & (rowsum[:, 0:1] < 1024.0)
    empty1 = (rowsum[:, 1:2] >= 1.0) & (rowsum[:, 1:2] < 1024.0)

    ev = ev_ref[...]                                          # [1, Q]
    x0 = jnp.where(empty0, ev, row0 * rnorm)
    x1 = jnp.where(empty1, ev, row1 * rnorm)
    x = x0 + x1                               # the mean's 0.5 is folded into w_ref

    # ProjectionNetwork (inp_merge='mlp', layer_norm_all_features=False):
    # tanh(Linear(dropout(x))) with dropout = identity at inference.
    y = jnp.dot(x, w_ref[...], preferred_element_type=jnp.float32) + b_ref[...]
    out_ref[...] = jnp.tanh(y)                                # [TB, D]


def search_module_forward(search_inputs, params):
    """JAX/Pallas equivalent of SearchModule.forward.

    search_inputs:
      'flat_query_vector_trunc'     : [B, S * 50] float32
      'impressions_size_trunc_norm' : [B, S]      float32 (defines S; unused in output)
      'clicks_size_trunc_norm'      : [B, S]      float32 (unused in output)
    params: 'empty_query_vector' [50], 'merge_w' [50, D] (transposed torch weight),
            'merge_b' [D]
    Returns: [B, 1, D] float32
    """
    impressions = search_inputs["impressions_size_trunc_norm"]
    B, S = impressions.shape
    Q = PRODUCT_QUERY_EMBEDDINGS_SIZE
    assert S >= 2, "SearchModule slices the first two sequence positions"
    SQ = S * Q
    D = params["merge_w"].shape[1]

    # q stays in its natural lane-dense flat form [B, S*Q]; no reshape needed.
    q = search_inputs["flat_query_vector_trunc"].astype(jnp.float32)
    assert q.shape == (B, SQ)
    ev = params["empty_query_vector"].reshape(1, Q).astype(jnp.float32)
    # Fold the mean-over-2-rows 0.5 into the weight (one-time param transform).
    w = (0.5 * params["merge_w"]).astype(jnp.float32)          # [Q, D]
    b = params["merge_b"].reshape(1, D).astype(jnp.float32)

    # Constant 0/1 selection matrices (VMEM-resident across all grid steps):
    #   sel_seq sums the S sequence positions of q^2 per embedding dim (-> sumsq),
    #   sel_row sums the integer-coded sign/zero info of sequence rows 0 and 1.
    sel_seq = jnp.tile(jnp.eye(Q, dtype=jnp.float32), (S, 1))           # [S*Q, Q]
    k_code = min(SQ, 128)                  # one lane group covers rows 0 and 1
    idx = jnp.arange(k_code)
    sel_row = jnp.stack([(idx < Q), (idx >= Q) & (idx < 2 * Q)],
                        axis=1).astype(jnp.float32)                     # [k_code, 2]

    # Batch tiling: tiles are multiples of 8 rows (sublane constraint); sized so
    # (a) the grid has >=2 steps whenever B allows it (v7x megacore actually gets
    # work on both TensorCores), and (b) the double-buffered footprint stays inside
    # the 32 MiB scoped-VMEM budget: a [4096, 400] f32 block lane-pads to 512 ->
    # 8 MiB/buffer; ~20 MiB total with the output and resident params.
    tb = max(8, min(_TB_MAX, _round_up(pl.cdiv(B, 2), 8)))
    b_pad = _round_up(B, tb)
    if b_pad != B:
        # Zero-padded rows are harmless: they take the empty-query branch, stay
        # finite, and are sliced off below.
        q = jnp.pad(q, ((0, b_pad - B), (0, 0)))
    grid = (b_pad // tb,)

    cost = pl.CostEstimate(
        flops=int(2 * b_pad * SQ * Q + 2 * b_pad * k_code * 2
                  + 2 * b_pad * Q * D + 4 * b_pad * SQ),
        transcendentals=int(b_pad * (Q + D)),                 # rsqrt + tanh
        bytes_accessed=int(4 * (b_pad * SQ + b_pad * D + SQ * Q
                                + k_code * 2 + Q + Q * D + D)),
    )

    kernel = functools.partial(_search_kernel, Q, k_code)

    out = pl.pallas_call(
        kernel,
        out_shape=jax.ShapeDtypeStruct((b_pad, D), jnp.float32),
        grid=grid,
        in_specs=[
            pl.BlockSpec((tb, SQ), lambda i: (i, 0)),         # q: tiled over batch
            pl.BlockSpec((SQ, Q), lambda i: (0, 0)),          # sel_seq: resident
            pl.BlockSpec((k_code, 2), lambda i: (0, 0)),      # sel_row: resident
            pl.BlockSpec((1, Q), lambda i: (0, 0)),           # ev: resident
            pl.BlockSpec((Q, D), lambda i: (0, 0)),           # W : resident
            pl.BlockSpec((1, D), lambda i: (0, 0)),           # b : resident
        ],
        out_specs=pl.BlockSpec((tb, D), lambda i: (i, 0)),
        compiler_params=pltpu.CompilerParams(
            dimension_semantics=("parallel",),                # megacore / 2-TC split
            vmem_limit_bytes=32 * 1024 * 1024,                # v5e default (16 MiB) binds
        ),
        cost_estimate=cost,
    )(q, sel_seq, sel_row, ev, w, b)

    return out[:B, None, :]                                   # [B, 1, D]


def _reference_forward(search_inputs, params):
    """Pure-JAX reference mirroring the torch module exactly."""
    impressions = search_inputs["impressions_size_trunc_norm"]
    B, S = impressions.shape
    Q = PRODUCT_QUERY_EMBEDDINGS_SIZE
    q = search_inputs["flat_query_vector_trunc"].reshape(B, S, Q)
    norm = jnp.maximum(jnp.sqrt(jnp.sum(q * q, axis=1, keepdims=True)), NORMALIZE_EPS)
    qn = q / norm
    mask = jnp.max(qn, axis=-1, keepdims=True) == 0.0
    qn = jnp.where(mask, params["empty_query_vector"].reshape(1, 1, Q), qn)
    x = jnp.mean(qn[:, :2, :], axis=1, keepdims=True)         # [B, 1, Q]
    y = jnp.tanh(x @ params["merge_w"] + params["merge_b"])
    return y


if __name__ == "__main__":
    key = jax.random.PRNGKey(0)
    k_ev, k_w, k_b, k_q, k_imp, k_clk, k_q2 = jax.random.split(key, 7)

    Q = PRODUCT_QUERY_EMBEDDINGS_SIZE
    D_MODEL = 32  # model_args.d_model

    # Deterministic synthetic parameters (shapes from the module __init__).
    params = {
        # torch.normal(mean=0, std=0.07, size=(50,))
        "empty_query_vector": 0.07 * jax.random.normal(k_ev, (Q,), dtype=jnp.float32),
        # nn.Linear(50, d_model): torch weight [D, Q]; stored transposed [Q, D] here.
        "merge_w": 0.05 * jax.random.normal(k_w, (Q, D_MODEL), dtype=jnp.float32),
        "merge_b": 0.05 * jax.random.normal(k_b, (D_MODEL,), dtype=jnp.float32),
    }

    # ---- small case (B=2, S=8): exercises the empty-query paths ---------------
    B, S = 2, 8
    q_flat = jax.random.normal(k_q, (B, S, Q), dtype=jnp.float32)
    q_flat = q_flat.at[0, 1, :].set(0.0)   # empty row inside the kept [:, :2] slice
    q_flat = q_flat.at[1, 0, :].set(0.0)
    q_flat = q_flat.at[1, 5, :].set(0.0)   # empty row outside the kept slice
    # Row with only negatives plus one exact zero (max == 0 but not all-zero):
    # checks that the kernel reproduces torch's max==0 test exactly.
    q_flat = q_flat.at[0, 0, :].set(-jnp.abs(q_flat[0, 0, :]))
    q_flat = q_flat.at[0, 0, 7].set(0.0)
    search_inputs = {
        "flat_query_vector_trunc": q_flat.reshape(B, S * Q),
        "impressions_size_trunc_norm": jax.random.normal(k_imp, (B, S), dtype=jnp.float32),
        "clicks_size_trunc_norm": jax.random.normal(k_clk, (B, S), dtype=jnp.float32),
    }

    out = jax.block_until_ready(search_module_forward(search_inputs, params))
    ref = _reference_forward(search_inputs, params)
    assert out.shape == (B, 1, D_MODEL), out.shape
    assert jnp.allclose(out, ref, atol=1e-5, rtol=1e-5), "small-case mismatch vs reference"

    # ---- larger case: exercises batch padding and a multi-tile grid -----------
    B2, S2 = 300, 8
    q2 = jax.random.normal(k_q2, (B2, S2, Q), dtype=jnp.float32)
    q2 = q2.at[17, 0, :].set(0.0)
    q2 = q2.at[123, 1, :].set(0.0)
    search_inputs2 = {
        "flat_query_vector_trunc": q2.reshape(B2, S2 * Q),
        "impressions_size_trunc_norm": jnp.zeros((B2, S2), jnp.float32),
        "clicks_size_trunc_norm": jnp.zeros((B2, S2), jnp.float32),
    }
    out2 = jax.block_until_ready(search_module_forward(search_inputs2, params))
    ref2 = _reference_forward(search_inputs2, params)
    assert out2.shape == (B2, 1, D_MODEL), out2.shape
    assert jnp.allclose(out2, ref2, atol=1e-5, rtol=1e-5), "large-case mismatch vs reference"

    print("KERNEL_OK")
</pallas_src>

<mosaic_0001>
module attributes {stable_mosaic.version = 11 : i64} {
  func.func @_search_kernel(%arg0: i32, %arg1: memref<8x400xf32, #tpu.memory_space<vmem>>, %arg2: memref<400x50xf32, #tpu.memory_space<vmem>>, %arg3: memref<128x2xf32, #tpu.memory_space<vmem>>, %arg4: memref<1x50xf32, #tpu.memory_space<vmem>>, %arg5: memref<50x32xf32, #tpu.memory_space<vmem>>, %arg6: memref<1x32xf32, #tpu.memory_space<vmem>>, %arg7: memref<8x32xf32, #tpu.memory_space<vmem>>) attributes {dimension_semantics = [#tpu.dimension_semantics<parallel>], iteration_bounds = array<i64: 1>, scalar_prefetch = 0 : i64, scratch_operands = 0 : i64, tpu.core_type = #tpu.core_type<tc>, window_params = [{transform_indices = @transform_0, window_bounds = array<i64: 8, 400>}, {pipeline_mode = #tpu.pipeline_mode<synchronous>, transform_indices = @transform_1, window_bounds = array<i64: 400, 50>}, {pipeline_mode = #tpu.pipeline_mode<synchronous>, transform_indices = @transform_2, window_bounds = array<i64: 128, 2>}, {pipeline_mode = #tpu.pipeline_mode<synchronous>, transform_indices = @transform_3, window_bounds = array<i64: 1, 50>}, {pipeline_mode = #tpu.pipeline_mode<synchronous>, transform_indices = @transform_4, window_bounds = array<i64: 50, 32>}, {pipeline_mode = #tpu.pipeline_mode<synchronous>, transform_indices = @transform_5, window_bounds = array<i64: 1, 32>}, {transform_indices = @transform_6, window_bounds = array<i64: 8, 32>}]} {
    %c0 = arith.constant 0 : index
    %c0_0 = arith.constant 0 : index
    %0 = vector.load %arg1[%c0, %c0_0] : memref<8x400xf32, #tpu.memory_space<vmem>>, vector<8x400xf32>
    %1 = arith.mulf %0, %0 : vector<8x400xf32>
    %c0_1 = arith.constant 0 : index
    %c0_2 = arith.constant 0 : index
    %2 = vector.load %arg2[%c0_1, %c0_2] : memref<400x50xf32, #tpu.memory_space<vmem>>, vector<400x50xf32>
    %cst = arith.constant dense<0.000000e+00> : vector<8x50xf32>
    %3 = tpu.matmul %1, %2, %cst {dimension_numbers = #tpu.dot_dimension_numbers<[1], [0], [0], [1], [0, 0, 1, 1], [], []>} : vector<8x400xf32>, vector<400x50xf32>, vector<8x50xf32> -> vector<8x50xf32>
    %cst_3 = arith.constant 1.000000e-24 : f32
    %4 = vector.broadcast %cst_3 : f32 to vector<8x50xf32>
    %5 = arith.maximumf %3, %4 : vector<8x50xf32>
    %6 = math.rsqrt %5 : vector<8x50xf32>
    %7 = vector.extract_strided_slice %0 {offsets = [0, 0], sizes = [8, 50], strides = [1, 1]} : vector<8x400xf32> to vector<8x50xf32>
    %8 = vector.extract_strided_slice %0 {offsets = [0, 50], sizes = [8, 50], strides = [1, 1]} : vector<8x400xf32> to vector<8x50xf32>
    %9 = vector.extract_strided_slice %0 {offsets = [0, 0], sizes = [8, 128], strides = [1, 1]} : vector<8x400xf32> to vector<8x128xf32>
    %cst_4 = arith.constant 0.000000e+00 : f32
    %10 = vector.broadcast %cst_4 : f32 to vector<8x128xf32>
    %11 = arith.cmpf ogt, %9, %10 : vector<8x128xf32>
    %cst_5 = arith.constant 0.000000e+00 : f32
    %12 = vector.broadcast %cst_5 : f32 to vector<8x128xf32>
    %13 = arith.cmpf oeq, %9, %12 : vector<8x128xf32>
    %cst_6 = arith.constant 1.000000e+00 : f32
    %cst_7 = arith.constant 0.000000e+00 : f32
    %14 = vector.broadcast %cst_6 : f32 to vector<8x128xf32>
    %15 = vector.broadcast %cst_7 : f32 to vector<8x128xf32>
    %16 = arith.select %13, %14, %15 : vector<8x128xi1>, vector<8x128xf32>
    %cst_8 = arith.constant 1.024000e+03 : f32
    %17 = vector.broadcast %cst_8 : f32 to vector<8x128xf32>
    %18 = arith.select %11, %17, %16 : vector<8x128xi1>, vector<8x128xf32>
    %c0_9 = arith.constant 0 : index
    %c0_10 = arith.constant 0 : index
    %19 = vector.load %arg3[%c0_9, %c0_10] : memref<128x2xf32, #tpu.memory_space<vmem>>, vector<128x2xf32>
    %cst_11 = arith.constant dense<0.000000e+00> : vector<8x2xf32>
    %20 = tpu.matmul %18, %19, %cst_11 {dimension_numbers = #tpu.dot_dimension_numbers<[1], [0], [0], [1], [0, 0, 1, 1], [], []>} : vector<8x128xf32>, vector<128x2xf32>, vector<8x2xf32> -> vector<8x2xf32>
    %21 = vector.extract_strided_slice %20 {offsets = [0, 0], sizes = [8, 1], strides = [1, 1]} : vector<8x2xf32> to vector<8x1xf32>
    %cst_12 = arith.constant 1.000000e+00 : f32
    %22 = vector.broadcast %cst_12 : f32 to vector<8x1xf32>
    %23 = arith.cmpf oge, %21, %22 : vector<8x1xf32>
    %24 = vector.extract_strided_slice %20 {offsets = [0, 0], sizes = [8, 1], strides = [1, 1]} : vector<8x2xf32> to vector<8x1xf32>
    %cst_13 = arith.constant 1.024000e+03 : f32
    %25 = vector.broadcast %cst_13 : f32 to vector<8x1xf32>
    %26 = arith.cmpf olt, %24, %25 : vector<8x1xf32>
    %27 = arith.andi %23, %26 : vector<8x1xi1>
    %28 = vector.extract_strided_slice %20 {offsets = [0, 1], sizes = [8, 1], strides = [1, 1]} : vector<8x2xf32> to vector<8x1xf32>
    %cst_14 = arith.constant 1.000000e+00 : f32
    %29 = vector.broadcast %cst_14 : f32 to vector<8x1xf32>
    %30 = arith.cmpf oge, %28, %29 : vector<8x1xf32>
    %31 = vector.extract_strided_slice %20 {offsets = [0, 1], sizes = [8, 1], strides = [1, 1]} : vector<8x2xf32> to vector<8x1xf32>
    %cst_15 = arith.constant 1.024000e+03 : f32
    %32 = vector.broadcast %cst_15 : f32 to vector<8x1xf32>
    %33 = arith.cmpf olt, %31, %32 : vector<8x1xf32>
    %34 = arith.andi %30, %33 : vector<8x1xi1>
    %c0_16 = arith.constant 0 : index
    %c0_17 = arith.constant 0 : index
    %35 = vector.load %arg4[%c0_16, %c0_17] : memref<1x50xf32, #tpu.memory_space<vmem>>, vector<1x50xf32>
    %36 = arith.mulf %7, %6 : vector<8x50xf32>
    %37 = vector.shape_cast %27 : vector<8x1xi1> to vector<8x1xi1>
    %38 = vector.broadcast %37 : vector<8x1xi1> to vector<8x50xi1>
    %39 = vector.shape_cast %35 : vector<1x50xf32> to vector<1x50xf32>
    %40 = vector.broadcast %39 : vector<1x50xf32> to vector<8x50xf32>
    %41 = arith.select %38, %40, %36 : vector<8x50xi1>, vector<8x50xf32>
    %42 = arith.mulf %8, %6 : vector<8x50xf32>
    %43 = vector.shape_cast %34 : vector<8x1xi1> to vector<8x1xi1>
    %44 = vector.broadcast %43 : vector<8x1xi1> to vector<8x50xi1>
    %45 = vector.shape_cast %35 : vector<1x50xf32> to vector<1x50xf32>
    %46 = vector.broadcast %45 : vector<1x50xf32> to vector<8x50xf32>
    %47 = arith.select %44, %46, %42 : vector<8x50xi1>, vector<8x50xf32>
    %48 = arith.addf %41, %47 : vector<8x50xf32>
    %c0_18 = arith.constant 0 : index
    %c0_19 = arith.constant 0 : index
    %49 = vector.load %arg5[%c0_18, %c0_19] : memref<50x32xf32, #tpu.memory_space<vmem>>, vector<50x32xf32>
    %cst_20 = arith.constant dense<0.000000e+00> : vector<8x32xf32>
    %50 = tpu.matmul %48, %49, %cst_20 {dimension_numbers = #tpu.dot_dimension_numbers<[1], [0], [0], [1], [0, 0, 1, 1], [], []>} : vector<8x50xf32>, vector<50x32xf32>, vector<8x32xf32> -> vector<8x32xf32>
    %c0_21 = arith.constant 0 : index
    %c0_22 = arith.constant 0 : index
    %51 = vector.load %arg6[%c0_21, %c0_22] : memref<1x32xf32, #tpu.memory_space<vmem>>, vector<1x32xf32>
    %52 = vector.broadcast %51 : vector<1x32xf32> to vector<8x32xf32>
    %53 = arith.addf %50, %52 : vector<8x32xf32>
    %54 = math.tanh %53 : vector<8x32xf32>
    %c0_23 = arith.constant 0 : index
    %c0_24 = arith.constant 0 : index
    %55 = vector.load %arg7[%c0_23, %c0_24] : memref<8x32xf32, #tpu.memory_space<vmem>>, vector<8x32xf32>
    tpu.vector_store %arg7[%c0_23, %c0_24], %54 {strides = array<i32>} : memref<8x32xf32, #tpu.memory_space<vmem>>, vector<8x32xf32>,
    return
  }
  func.func @transform_0(%arg0: i32) -> (i32, i32) {
    %c0_i32 = arith.constant 0 : i32
    %c0_i32_0 = arith.constant 0 : i32
    return %arg0, %c0_i32 : i32, i32
  }
  func.func @transform_1(%arg0: i32) -> (i32, i32) {
    %c0_i32 = arith.constant 0 : i32
    %c0_i32_0 = arith.constant 0 : i32
    %c0_i32_1 = arith.constant 0 : i32
    return %c0_i32, %c0_i32_0 : i32, i32
  }
  func.func @transform_2(%arg0: i32) -> (i32, i32) {
    %c0_i32 = arith.constant 0 : i32
    %c0_i32_0 = arith.constant 0 : i32
    %c0_i32_1 = arith.constant 0 : i32
    return %c0_i32, %c0_i32_0 : i32, i32
  }
  func.func @transform_3(%arg0: i32) -> (i32, i32) {
    %c0_i32 = arith.constant 0 : i32
    %c0_i32_0 = arith.constant 0 : i32
    %c0_i32_1 = arith.constant 0 : i32
    return %c0_i32, %c0_i32_0 : i32, i32
  }
  func.func @transform_4(%arg0: i32) -> (i32, i32) {
    %c0_i32 = arith.constant 0 : i32
    %c0_i32_0 = arith.constant 0 : i32
    %c0_i32_1 = arith.constant 0 : i32
    return %c0_i32, %c0_i32_0 : i32, i32
  }
  func.func @transform_5(%arg0: i32) -> (i32, i32) {
    %c0_i32 = arith.constant 0 : i32
    %c0_i32_0 = arith.constant 0 : i32
    %c0_i32_1 = arith.constant 0 : i32
    return %c0_i32, %c0_i32_0 : i32, i32
  }
  func.func @transform_6(%arg0: i32) -> (i32, i32) {
    %c0_i32 = arith.constant 0 : i32
    %c0_i32_0 = arith.constant 0 : i32
    return %arg0, %c0_i32 : i32, i32
  }
}

</mosaic_0001>

<llo_original>
// kernel: tpu_custom_call.1
$region0: #{tpu_custom_call.1}
  #allocation0 [shape = 'u32[]', space=smem, size = 0x4, offset = 0x4, fixed_abs, tag = 'smem constant byte address 0x4 - core index']
  #allocation1 [shape = 'u32[72,128]{1,0:T(1,128)}', space=vmem, size = 0x9000, scoped, tag = 'internal scratch']
  %s0 = inlined_call_operand.vmem [shape: f32[8,400], index: 0, kind: input, shape index: {}]
  %s1 = inlined_call_operand.vmem [shape: f32[400,50], index: 1, kind: input, shape index: {}]
  %s2 = inlined_call_operand.vmem [shape: f32[128,2], index: 2, kind: input, shape index: {}]
  %s3 = inlined_call_operand.vmem [shape: f32[1,50], index: 3, kind: input, shape index: {}]
  %s4 = inlined_call_operand.vmem [shape: f32[50,32], index: 4, kind: input, shape index: {}]
  %s5 = inlined_call_operand.vmem [shape: f32[1,32], index: 5, kind: input, shape index: {}]
  %s6 = inlined_call_operand.hbm [shape: f32[8,32], index: 6, kind: output, shape index: {}]
  %s7 = sld [smem:[#allocation0]]
  $region34: #{tpu_custom_call.1} parent=0
    _
  %s9 = ssub.s32 1, %s7
  %s10 = scalar_select 0, %s9, %s7
  $region1: #{tpu_custom_call.1} parent=0
    #allocation2 [shape = 'u8[4096]{0}', space=vmem, size = 0x1000, scoped, tag = 'output window, operand 0, single buffered']
    #allocation3 [shape = 's32[1]{0}', space=sflag, size = 0x4, scoped, tag = 'scoped memory for tpu_custom_call.1']
    %11 = vsyncpa [#allocation3], 0
    // Predicated region
    $region2: #{tpu_custom_call.1} parent=1 // pred_check
      _
    $region3: #{tpu_custom_call.1} parent=1 // pred_check_branch
      %13 = sbr.rel (0) target = $region5
    $region4: #{tpu_custom_call.1} parent=1 // pred_region
      _
    $region5: #{tpu_custom_call.1} parent=1 // pred_fallthru
      _
    // Predicated region
    $region6: #{tpu_custom_call.1} parent=1 // pred_check
      _
    $region7: #{tpu_custom_call.1} parent=1 // pred_check_branch
      %15 = sbr.rel (0) target = $region9
    $region8: #{tpu_custom_call.1} parent=1 // pred_region
      _
    $region9: #{tpu_custom_call.1} parent=1 // pred_fallthru
      _
    // Predicated region
    $region10: #{tpu_custom_call.1} parent=1 // pred_check
      _
    $region11: #{tpu_custom_call.1} parent=1 // pred_check_branch
      %17 = sbr.rel (0) target = $region13
    $region12: #{tpu_custom_call.1} parent=1 // pred_region
      _
    $region13: #{tpu_custom_call.1} parent=1 // pred_fallthru
      _
    // Predicated region
    $region14: #{tpu_custom_call.1} parent=1 // pred_check
      _
    $region15: #{tpu_custom_call.1} parent=1 // pred_check_branch
      %19 = sbr.rel (0) target = $region17
    $region16: #{tpu_custom_call.1} parent=1 // pred_region
      _
    $region17: #{tpu_custom_call.1} parent=1 // pred_fallthru
      _
    // Predicated region
    $region18: #{tpu_custom_call.1} parent=1 // pred_check
      _
    $region19: #{tpu_custom_call.1} parent=1 // pred_check_branch
      %21 = sbr.rel (0) target = $region21
    $region20: #{tpu_custom_call.1} parent=1 // pred_region
      _
    $region21: #{tpu_custom_call.1} parent=1 // pred_fallthru
      _
    // Predicated region
    $region22: #{tpu_custom_call.1} parent=1 // pred_check
      _
    $region23: #{tpu_custom_call.1} parent=1 // pred_check_branch
      %23 = sbr.rel (0) target = $region25
    $region24: #{tpu_custom_call.1} parent=1 // pred_region
      _
    $region25: #{tpu_custom_call.1} parent=1 // pred_fallthru
      _
    %v24 = vld [vmem:[%s0] sm:$0xff]
    %v25 = vld [vmem:[%s0 + $0x8] sm:$0xff]
    %v26 = vld [vmem:[%s0 + $0x10] sm:$0xff]
    %v27 = vld [vmem:[%s0 + $0x18] sm:$0xff]
    %v28 = vmul.f32 %v24, %v24
    %v29 = vmul.f32 %v25, %v25
    %v30 = vmul.f32 %v26, %v26
    %v31 = vmul.f32 %v27, %v27
    %v32 = vld [vmem:[%s1] sm:$0xff]
    %v33 = vld [vmem:[%s1 + $0x8] sm:$0xff]
    %v34 = vld [vmem:[%s1 + $0x10] sm:$0xff]
    %v35 = vld [vmem:[%s1 + $0x18] sm:$0xff]
    %v36 = vld [vmem:[%s1 + $0x20] sm:$0xff]
    %v37 = vld [vmem:[%s1 + $0x28] sm:$0xff]
    %v38 = vld [vmem:[%s1 + $0x30] sm:$0xff]
    %v39 = vld [vmem:[%s1 + $0x38] sm:$0xff]
    %v40 = vld [vmem:[%s1 + $0x40] sm:$0xff]
    %v41 = vld [vmem:[%s1 + $0x48] sm:$0xff]
    %v42 = vld [vmem:[%s1 + $0x50] sm:$0xff]
    %v43 = vld [vmem:[%s1 + $0x58] sm:$0xff]
    %v44 = vld [vmem:[%s1 + $0x60] sm:$0xff]
    %v45 = vld [vmem:[%s1 + $0x68] sm:$0xff]
    %v46 = vld [vmem:[%s1 + $0x70] sm:$0xff]
    %v47 = vld [vmem:[%s1 + $0x78] sm:$0xff]
    %v48 = vld [vmem:[%s1 + $0x80] sm:$0xff]
    %v49 = vld [vmem:[%s1 + $0x88] sm:$0xff]
    %v50 = vld [vmem:[%s1 + $0x90] sm:$0xff]
    %v51 = vld [vmem:[%s1 + $0x98] sm:$0xff]
    %v52 = vld [vmem:[%s1 + $0xa0] sm:$0xff]
    %v53 = vld [vmem:[%s1 + $0xa8] sm:$0xff]
    %v54 = vld [vmem:[%s1 + $0xb0] sm:$0xff]
    %v55 = vld [vmem:[%s1 + $0xb8] sm:$0xff]
    %v56 = vld [vmem:[%s1 + $0xc0] sm:$0xff]
    %v57 = vld [vmem:[%s1 + $0xc8] sm:$0xff]
    %v58 = vld [vmem:[%s1 + $0xd0] sm:$0xff]
    %v59 = vld [vmem:[%s1 + $0xd8] sm:$0xff]
    %v60 = vld [vmem:[%s1 + $0xe0] sm:$0xff]
    %v61 = vld [vmem:[%s1 + $0xe8] sm:$0xff]
    %v62 = vld [vmem:[%s1 + $0xf0] sm:$0xff]
    %v63 = vld [vmem:[%s1 + $0xf8] sm:$0xff]
    %v64 = vld [vmem:[%s1 + $0x100] sm:$0xff]
    %v65 = vld [vmem:[%s1 + $0x108] sm:$0xff]
    %v66 = vld [vmem:[%s1 + $0x110] sm:$0xff]
    %v67 = vld [vmem:[%s1 + $0x118] sm:$0xff]
    %v68 = vld [vmem:[%s1 + $0x120] sm:$0xff]
    %v69 = vld [vmem:[%s1 + $0x128] sm:$0xff]
    %v70 = vld [vmem:[%s1 + $0x130] sm:$0xff]
    %v71 = vld [vmem:[%s1 + $0x138] sm:$0xff]
    %v72 = vld [vmem:[%s1 + $0x140] sm:$0xff]
    %v73 = vld [vmem:[%s1 + $0x148] sm:$0xff]
    %v74 = vld [vmem:[%s1 + $0x150] sm:$0xff]
    %v75 = vld [vmem:[%s1 + $0x158] sm:$0xff]
    %v76 = vld [vmem:[%s1 + $0x160] sm:$0xff]
    %v77 = vld [vmem:[%s1 + $0x168] sm:$0xff]
    %v78 = vld [vmem:[%s1 + $0x170] sm:$0xff]
    %v79 = vld [vmem:[%s1 + $0x178] sm:$0xff]
    %v80 = vld [vmem:[%s1 + $0x180] sm:$0xff]
    %v81 = vld [vmem:[%s1 + $0x188] sm:$0xff]
    %vm82 = vcmask 130048
    %v84 = vsel %vm82, %v31, 0
    %86 = vmatpush.msra.mxu0 %v47
    %87 = vmatpush.msra.mxu0 %v46
    %88 = vmatpush.msra.mxu0 %v45
    %89 = vmatpush.msra.mxu0 %v44
    %90 = vmatpush.msra.mxu0 %v43
    %91 = vmatpush.msra.mxu0 %v42
    %92 = vmatpush.msra.mxu0 %v41
    %93 = vmatpush.msra.mxu0 %v40
    %94 = vmatpush.msra.mxu0 %v39
    %95 = vmatpush.msra.mxu0 %v38
    %96 = vmatpush.msra.mxu0 %v37
    %97 = vmatpush.msra.mxu0 %v36
    %98 = vmatpush.msra.mxu0 %v35
    %99 = vmatpush.msra.mxu0 %v34
    %100 = vmatpush.msra.mxu0 %v33
    %101 = vmatpush.msra.mxu0 %v32
    %102 = vmatmul.f32.gmra.mxu0 %v28
    %v103 = vpop.f32.mrf.mxu0
    %v104 = vadd.f32 0.0, %v103
    %105 = vdwg.mxu0
    %106 = vmatpush.msra.mxu0 %v63
    %107 = vmatpush.msra.mxu0 %v62
    %108 = vmatpush.msra.mxu0 %v61
    %109 = vmatpush.msra.mxu0 %v60
    %110 = vmatpush.msra.mxu0 %v59
    %111 = vmatpush.msra.mxu0 %v58
    %112 = vmatpush.msra.mxu0 %v57
    %113 = vmatpush.msra.mxu0 %v56
    %114 = vmatpush.msra.mxu0 %v55
    %115 = vmatpush.msra.mxu0 %v54
    %116 = vmatpush.msra.mxu0 %v53
    %117 = vmatpush.msra.mxu0 %v52
    %118 = vmatpush.msra.mxu0 %v51
    %119 = vmatpush.msra.mxu0 %v50
    %120 = vmatpush.msra.mxu0 %v49
    %121 = vmatpush.msra.mxu0 %v48
    %122 = vmatmul.f32.gmra.mxu0 %v29
    %v123 = vpop.f32.mrf.mxu0
    %v124 = vadd.f32 %v104, %v123
    %125 = vdwg.mxu0
    %126 = vmatpush.msra.mxu0 %v79
    %127 = vmatpush.msra.mxu0 %v78
    %128 = vmatpush.msra.mxu0 %v77
    %129 = vmatpush.msra.mxu0 %v76
    %130 = vmatpush.msra.mxu0 %v75
    %131 = vmatpush.msra.mxu0 %v74
    %132 = vmatpush.msra.mxu0 %v73
    %133 = vmatpush.msra.mxu0 %v72
    %134 = vmatpush.msra.mxu0 %v71
    %135 = vmatpush.msra.mxu0 %v70
    %136 = vmatpush.msra.mxu0 %v69
    %137 = vmatpush.msra.mxu0 %v68
    %138 = vmatpush.msra.mxu0 %v67
    %139 = vmatpush.msra.mxu0 %v66
    %140 = vmatpush.msra.mxu0 %v65
    %141 = vmatpush.msra.mxu0 %v64
    %142 = vmatmul.f32.gmra.mxu0 %v30
    %v143 = vpop.f32.mrf.mxu0
    %v144 = vadd.f32 %v124, %v143
    %145 = vdwg.mxu0
    %146 = vmatpush.msra.mxu0 0.0
    %147 = vmatpush.msra.mxu0 0.0
    %148 = vmatpush.msra.mxu0 0.0
    %149 = vmatpush.msra.mxu0 0.0
    %150 = vmatpush.msra.mxu0 0.0
    %151 = vmatpush.msra.mxu0 0.0
    %152 = vmatpush.msra.mxu0 0.0
    %153 = vmatpush.msra.mxu0 0.0
    %154 = vmatpush.msra.mxu0 0.0
    %155 = vmatpush.msra.mxu0 0.0
    %156 = vmatpush.msra.mxu0 0.0
    %157 = vmatpush.msra.mxu0 0.0
    %158 = vmatpush.msra.mxu0 0.0
    %159 = vmatpush.msra.mxu0 0.0
    %160 = vmatpush.msra.mxu0 %v81
    %161 = vmatpush.msra.mxu0 %v80
    %162 = vmatmul.f32.gmra.mxu0 %v84
    %v163 = vpop.f32.mrf.mxu0
    %v164 = vadd.f32 %v144, %v163
    %165 = vdwg.mxu0
    %v166 = vmax.f32 %v164, 1e-24
    %v167 = vrsqrt.pop %v166
    %v168 = vmul.f32 %v167, %v166
    %v169 = vmul.f32 %v168, %v167
    %v170 = vmul.f32 0.5, %v169
    %v171 = vsub.f32 1.5, %v170
    %v172 = vmul.f32 %v167, %v171
    %vm173 = vweird.f32 %v166
    %vm174 = vweird.f32 %v167
    %vm175 = vmor %vm173, %vm174
    %v176 = vsel %vm175, %v167, %v172
    %vm177 = vcmp.gt.f32.partialorder %v24, 0.0
    %vm178 = vcmp.eq.f32.partialorder %v24, 0.0
    %v179 = vsel %vm178, 1.0, 0.0
    %v180 = vsel %vm177, 1024.0, %v179
    %v181 = vld [vmem:[%s2] sm:$0xff]
    %v182 = vld [vmem:[%s2 + $0x8] sm:$0xff]
    %v183 = vld [vmem:[%s2 + $0x10] sm:$0xff]
    %v184 = vld [vmem:[%s2 + $0x18] sm:$0xff]
    %v185 = vld [vmem:[%s2 + $0x20] sm:$0xff]
    %v186 = vld [vmem:[%s2 + $0x28] sm:$0xff]
    %v187 = vld [vmem:[%s2 + $0x30] sm:$0xff]
    %v188 = vld [vmem:[%s2 + $0x38] sm:$0xff]
    %v189 = vld [vmem:[%s2 + $0x40] sm:$0xff]
    %v190 = vld [vmem:[%s2 + $0x48] sm:$0xff]
    %v191 = vld [vmem:[%s2 + $0x50] sm:$0xff]
    %v192 = vld [vmem:[%s2 + $0x58] sm:$0xff]
    %v193 = vld [vmem:[%s2 + $0x60] sm:$0xff]
    %v194 = vld [vmem:[%s2 + $0x68] sm:$0xff]
    %v195 = vld [vmem:[%s2 + $0x70] sm:$0xff]
    %v196 = vld [vmem:[%s2 + $0x78] sm:$0xff]
    %197 = vmatpush.msra.mxu0 %v196
    %198 = vmatpush.msra.mxu0 %v195
    %199 = vmatpush.msra.mxu0 %v194
    %200 = vmatpush.msra.mxu0 %v193
    %201 = vmatpush.msra.mxu0 %v192
    %202 = vmatpush.msra.mxu0 %v191
    %203 = vmatpush.msra.mxu0 %v190
    %204 = vmatpush.msra.mxu0 %v189
    %205 = vmatpush.msra.mxu0 %v188
    %206 = vmatpush.msra.mxu0 %v187
    %207 = vmatpush.msra.mxu0 %v186
    %208 = vmatpush.msra.mxu0 %v185
    %209 = vmatpush.msra.mxu0 %v184
    %210 = vmatpush.msra.mxu0 %v183
    %211 = vmatpush.msra.mxu0 %v182
    %212 = vmatpush.msra.mxu0 %v181
    %213 = vmatmul.f32.gmra.mxu0 %v180
    %v214 = vpop.f32.mrf.mxu0
    %v215 = vadd.f32 0.0, %v214
    %216 = vdwg.mxu0
    %vm217 = vcmp.ge.f32.partialorder %v215, 1.0
    %vm218 = vcmp.lt.f32.partialorder %v215, 1024.0
    %vm219 = vmand %vm217, %vm218
    %v220 = vld [vmem:[%s3] sm:$0x1]
    %v221 = vmul.f32 %v24, %v176
    %v222 = vsel %vm219, 1, 0
    %223 = vset.pattern.permute.xlu0 0
    %224 = vperm.xlu0 %223, %v222
    %v225 = vpop.permute.xlu0 %224
    %vm226 = vcmp.eq.s32.totalorder %v225, 1
    %v228 = vperm.slane %v220, 0
    %v230 = vsel %vm226, %v228, %v221
    %232 = vrot.lane.b32.xlu0 %v176, 50
    %v233 = vpop.permute.xlu0 %232
    %v235 = vmul.f32 %v24, %v233
    %236 = vset.pattern.permute.xlu0 1
    %237 = vperm.xlu0 %236, %v222
    %v238 = vpop.permute.xlu0 %237
    %vm239 = vcmp.eq.s32.totalorder %v238, 1
    %241 = vrot.lane.b32.xlu0 %v235, 78
    %v242 = vpop.permute.xlu0 %241
    %v244 = vsel %vm239, %v228, %v242
    %v245 = vadd.f32 %v230, %v244
    %v246 = vld [vmem:[%s4] sm:$0xff]
    %v247 = vld [vmem:[%s4 + $0x8] sm:$0xff]
    %v248 = vld [vmem:[%s4 + $0x10] sm:$0xff]
    %v249 = vld [vmem:[%s4 + $0x18] sm:$0xff]
    %v250 = vld [vmem:[%s4 + $0x20] sm:$0xff]
    %v251 = vld [vmem:[%s4 + $0x28] sm:$0xff]
    %v252 = vld [vmem:[%s4 + $0x30] sm:$0x3]
    %v253 = vld [vmem:[%s5] sm:$0x1]
    %v255 = vperm.slane %v253, 0
    %vm257 = vcmask 408576
    %v259 = vsel %vm257, %v245, 0
    %vm261 = vcmask 1041408
    %v263 = vsel %vm261, %v252, 0
    %265 = vmatpush.msra.mxu0 0.0
    %266 = vmatpush.msra.mxu0 0.0
    %267 = vmatpush.msra.mxu0 0.0
    %268 = vmatpush.msra.mxu0 0.0
    %269 = vmatpush.msra.mxu0 0.0
    %270 = vmatpush.msra.mxu0 0.0
    %271 = vmatpush.msra.mxu0 0.0
    %272 = vmatpush.msra.mxu0 0.0
    %273 = vmatpush.msra.mxu0 0.0
    %274 = vmatpush.msra.mxu0 %v263
    %275 = vmatpush.msra.mxu0 %v251
    %276 = vmatpush.msra.mxu0 %v250
    %277 = vmatpush.msra.mxu0 %v249
    %278 = vmatpush.msra.mxu0 %v248
    %279 = vmatpush.msra.mxu0 %v247
    %280 = vmatpush.msra.mxu0 %v246
    %281 = vmatmul.f32.gmra.mxu0 %v259
    %v282 = vpop.f32.mrf.mxu0
    %v283 = vadd.f32 %v255, %v282
    %284 = vdwg.mxu0
    %v285 = vtanh.pop %v283
    %vm286 = vcmask 261120
    %287 = vst.msk [vmem:[#allocation2] sm:$0xff] %vm286, %v285
    // Predicated region
    $region26: #{tpu_custom_call.1} parent=1 // pred_check
      _
    $region27: #{tpu_custom_call.1} parent=1 // pred_check_branch
      %289 = sbr.rel (0) target = $region29
    $region28: #{tpu_custom_call.1} parent=1 // pred_region
      %291 = vsyncadd [#allocation3], 0
      %s293 = sshll.u32 [#allocation2], 4
      %s294 = int_to_ptr.vmem [resolvable:$true] %s293
      %s295 = sshll.u32 %s6, 4
      %s296 = int_to_ptr.hbm [resolvable:$true] %s295
      %298 = dma.vmem_to_hbm [thread:$0]  %s294, 128, %s296, [#allocation3]
    $region29: #{tpu_custom_call.1} parent=1 // pred_fallthru
      _
    // Predicated region
    $region30: #{tpu_custom_call.1} parent=1 // pred_check
      _
    $region31: #{tpu_custom_call.1} parent=1 // pred_check_branch
      %300 = sbr.rel (0) target = $region33
    $region32: #{tpu_custom_call.1} parent=1 // pred_region
      %302 = dma.done [#allocation3], 128
    $region33: #{tpu_custom_call.1} parent=1 // pred_fallthru
      _
    %303 = vsyncpa [#allocation3], 1

</llo_original>
